<compile_context>
chip_gen: v7x
topology: tpu7x:2x2x1
jax: 0.10.0
libtpu: 0.0.40
codegen_flags: <defaults>
</compile_context>

<pallas_src>
import functools

import jax
import jax.numpy as jnp
from jax.experimental import pallas as pl
from jax.experimental.pallas import tpu as pltpu


def _ffn_kernel(x_ref, scale_ref, bias_ref, w1_ref, b1_ref, w2_ref, b2_ref,
                o_ref, xs_ref, *acc_scratch, compute_dtype):
    # acc_scratch is () for f32 outputs (accumulate directly into o_ref) and
    # (acc_ref,) for 16-bit outputs.
    acc_ref = acc_scratch[0] if acc_scratch else o_ref
    k = pl.program_id(1)

    @pl.when(k == 0)
    def _init():
        # Hoisted once-per-row-tile prologue: ada scale/bias in f32, then a
        # single pack to the MXU operand dtype, reused by every H slice.
        xs = scale_ref[...] * x_ref[...].astype(jnp.float32) + bias_ref[...]
        xs_ref[...] = xs.astype(compute_dtype)
        acc_ref[...] = jnp.zeros_like(acc_ref)

    # First matmul (this H slice): bf16 operands, f32 accumulation on the MXU.
    h = jnp.dot(xs_ref[...], w1_ref[...], preferred_element_type=jnp.float32)
    h = jnp.maximum(h + b1_ref[...], 0.0)
    # TODO(synk): dropout omitted (inference identity); a training-mode kernel
    # would seed pltpu.prng once per row tile and mask h per H slice.

    # Partial contribution of this H slice to the output.
    acc_ref[...] += jnp.dot(h.astype(compute_dtype), w2_ref[...],
                            preferred_element_type=jnp.float32)

    @pl.when(k == pl.num_programs(1) - 1)
    def _finalize():
        o_ref[...] = (acc_ref[...] + b2_ref[...]).astype(o_ref.dtype)


def _round_up(a, b):
    return ((a + b - 1) // b) * b


def _vmem_capacity_bytes():
    """Per-core VMEM capacity; conservative v7x fallback (64 MiB)."""
    try:
        cap = int(pltpu.get_tpu_info().vmem_capacity_bytes)
        if cap >= 32 * 1024 * 1024:
            return cap
    except Exception:
        pass
    return 64 * 1024 * 1024


def positionwise_ffn(x, ada_scale, ada_bias, w1, b1, w2, b2, *,
                     tm=512, th=1024, compute_dtype=jnp.bfloat16,
                     weight_buffers=None):
    """x: (B, L, D).  w1: (D, H), w2: (H, D)  (nn.Linear weights pre-transposed
    to (in, out) layout).  Returns (B, L, D) in x.dtype."""
    B, L, D = x.shape
    H = w1.shape[1]
    M = B * L

    out_dtype = x.dtype
    xbytes = jnp.dtype(x.dtype).itemsize
    obytes = jnp.dtype(out_dtype).itemsize
    wbytes = jnp.dtype(compute_dtype).itemsize
    need_acc = out_dtype != jnp.float32        # 16-bit out -> separate f32 acc

    # Row-tile sublane alignment: 8 for 32-bit x/out streams, 16 for 16-bit.
    row_align = 8 if min(xbytes, obytes) >= 4 else 16

    capacity = _vmem_capacity_bytes()
    budget = (capacity * 3) // 4               # 48 MiB v7x / 96 MiB v5e-v6e
    vmem_limit = (capacity * 7) // 8           # below physical, above budget

    # --- tile selection -----------------------------------------------------
    tm_eff = min(tm, _round_up(M, row_align))
    tm_eff = max(row_align, (tm_eff // row_align) * row_align)
    # v7x has 2 TensorCores sharing the chip: keep >= 2 "parallel" row tiles
    # whenever the row count allows it.
    if tm_eff > row_align and -(-M // tm_eff) < 2:
        tm_eff = max(row_align, _round_up(-(-M // 2), row_align))

    th_eff = max(128, min((th // 128) * 128, _round_up(H, 128)))

    def vmem_est(tm_, th_):
        b = 2 * tm_ * D * xbytes               # x blocks (double-buffered)
        b += 2 * tm_ * D * obytes              # out blocks (double-buffered)
        b += tm_ * D * wbytes                  # hoisted xs scratch
        if need_acc:
            b += tm_ * D * 4                   # f32 accumulator scratch
        b += 2 * 2 * D * th_ * wbytes          # W1 + W2, each double-buffered
        b += tm_ * th_ * (4 + wbytes)          # h (f32) + bf16-cast temporaries
        b += 4 * (2 * th_ + 3 * D) * 4         # biases / scale (generous)
        return b

    while vmem_est(tm_eff, th_eff) > budget:
        if th_eff > 256:
            th_eff = max(256, ((th_eff // 2) // 128) * 128)
        elif tm_eff > 2 * row_align:
            tm_eff = max(row_align, _round_up(tm_eff // 2, row_align))
        elif th_eff > 128:
            th_eff = 128
        else:
            break                               # smallest sane tiles; proceed

    # Pad H up to a tile multiple with zero weight columns/rows (exact: the
    # padded slice contributes relu(x@0 + 0) @ 0 == 0).  Keeps weight
    # residency bounded instead of falling back to "full H resident".
    H_pad = _round_up(H, th_eff)

    # --- operand prep (weights: one-time cast/pad; activations untouched) ---
    x2 = x.reshape(M, D)
    scale2 = ada_scale.reshape(1, D).astype(jnp.float32)
    bias2 = ada_bias.reshape(1, D).astype(jnp.float32)
    w1c = w1.astype(compute_dtype)
    w2c = w2.astype(compute_dtype)
    b1_2 = b1.reshape(1, H).astype(jnp.float32)
    b2_2 = b2.reshape(1, D).astype(jnp.float32)
    if H_pad != H:
        w1c = jnp.pad(w1c, ((0, 0), (0, H_pad - H)))
        b1_2 = jnp.pad(b1_2, ((0, 0), (0, H_pad - H)))
        w2c = jnp.pad(w2c, ((0, H_pad - H), (0, 0)))

    grid = (pl.cdiv(M, tm_eff), H_pad // th_eff)

    def w_spec(shape, index_map):
        if weight_buffers is not None and weight_buffers != 2:
            return pl.BlockSpec(shape, index_map,
                                pipeline_mode=pl.Buffered(weight_buffers))
        return pl.BlockSpec(shape, index_map)

    scratch = [pltpu.VMEM((tm_eff, D), compute_dtype)]   # hoisted xs
    if need_acc:
        scratch.append(pltpu.VMEM((tm_eff, D), jnp.float32))

    cost = pl.CostEstimate(
        flops=4 * M * D * H,                              # two M x D x H matmuls
        transcendentals=0,
        bytes_accessed=(M * D * (xbytes + obytes)         # x in + y out
                        + 2 * D * H_pad * wbytes          # W1 + W2
                        + (H_pad + 3 * D) * 4),           # b1, b2, scale, bias
    )

    kernel = functools.partial(_ffn_kernel, compute_dtype=compute_dtype)

    out = pl.pallas_call(
        kernel,
        out_shape=jax.ShapeDtypeStruct((M, D), out_dtype),
        grid_spec=pltpu.PrefetchScalarGridSpec(
            num_scalar_prefetch=0,
            grid=grid,
            in_specs=[
                pl.BlockSpec((tm_eff, D), lambda i, k: (i, 0)),   # x rows (resident over k)
                pl.BlockSpec((1, D), lambda i, k: (0, 0)),        # ada_scale
                pl.BlockSpec((1, D), lambda i, k: (0, 0)),        # ada_bias
                w_spec((D, th_eff), lambda i, k: (0, k)),         # W1[:, k-slice]
                pl.BlockSpec((1, th_eff), lambda i, k: (0, k)),   # b1[k-slice]
                w_spec((th_eff, D), lambda i, k: (k, 0)),         # W2[k-slice, :]
                pl.BlockSpec((1, D), lambda i, k: (0, 0)),        # b2
            ],
            out_specs=pl.BlockSpec((tm_eff, D), lambda i, k: (i, 0)),
            scratch_shapes=scratch,
        ),
        compiler_params=pltpu.CompilerParams(
            dimension_semantics=("parallel", "arbitrary"),
            vmem_limit_bytes=vmem_limit,
        ),
        cost_estimate=cost,
    )(x2, scale2, bias2, w1c, b1_2, w2c, b2_2)

    return out.reshape(B, L, D)


def _reference(x, ada_scale, ada_bias, w1, b1, w2, b2):
    xs = ada_scale.reshape(1, 1, -1) * x + ada_bias.reshape(1, 1, -1)
    h = jnp.maximum(jnp.einsum("bld,dh->blh", xs, w1) + b1, 0.0)
    return jnp.einsum("blh,hd->bld", h, w2) + b2


if __name__ == "__main__":
    B, L, D, H = 2, 8, 128, 256  # batch, seq, idim, hidden_units

    key = jax.random.PRNGKey(0)
    kx, kw1, kb1, kw2, kb2, ks, kb = jax.random.split(key, 7)

    x = jax.random.normal(kx, (B, L, D), dtype=jnp.float32)

    # nn.Linear-style uniform(-1/sqrt(fan_in), +) init, (in, out) layout.
    lim1 = 1.0 / (D ** 0.5)
    lim2 = 1.0 / (H ** 0.5)
    w1 = jax.random.uniform(kw1, (D, H), minval=-lim1, maxval=lim1, dtype=jnp.float32)
    b1 = jax.random.uniform(kb1, (H,), minval=-lim1, maxval=lim1, dtype=jnp.float32)
    w2 = jax.random.uniform(kw2, (H, D), minval=-lim2, maxval=lim2, dtype=jnp.float32)
    b2 = jax.random.uniform(kb2, (D,), minval=-lim2, maxval=lim2, dtype=jnp.float32)
    # Non-trivial ada params so the scale/bias path is actually exercised
    # (the module inits them to ones/zeros).
    ada_scale = (1.0 + 0.1 * jax.random.normal(ks, (1, 1, D))).astype(jnp.float32)
    ada_bias = (0.1 * jax.random.normal(kb, (1, 1, D))).astype(jnp.float32)

    # 1) Default configuration (f32 streams; >=2 row tiles; acc-free f32 path).
    ref = _reference(x, ada_scale, ada_bias, w1, b1, w2, b2)
    out = positionwise_ffn(x, ada_scale, ada_bias, w1, b1, w2, b2)
    out = jax.block_until_ready(out)
    assert out.shape == (B, L, D)
    assert jnp.allclose(out, ref, atol=3e-2, rtol=3e-2), \
        float(jnp.max(jnp.abs(out - ref)))

    # 2) Small forced tiles + non-divisible row count: exercises the multi-step
    #    H reduction accumulating directly into o_ref and the unpadded row
    #    boundary (OOB boundary writes dropped by Pallas).
    x_odd = x[:, :7, :]                               # M = 14, not a tile multiple
    ref_odd = _reference(x_odd, ada_scale, ada_bias, w1, b1, w2, b2)
    out_odd = positionwise_ffn(x_odd, ada_scale, ada_bias, w1, b1, w2, b2,
                               tm=8, th=128)
    out_odd = jax.block_until_ready(out_odd)
    assert out_odd.shape == (B, 7, D)
    assert jnp.allclose(out_odd, ref_odd, atol=3e-2, rtol=3e-2), \
        float(jnp.max(jnp.abs(out_odd - ref_odd)))

    # 3) bf16 activation streams (halved x/y HBM traffic + VMEM residency):
    #    exercises the f32 scratch-accumulator path for 16-bit outputs.
    x_bf = x.astype(jnp.bfloat16)
    ref_bf = _reference(x_bf.astype(jnp.float32), ada_scale, ada_bias, w1, b1, w2, b2)
    out_bf = positionwise_ffn(x_bf, ada_scale, ada_bias, w1, b1, w2, b2, th=128)
    out_bf = jax.block_until_ready(out_bf)
    assert out_bf.dtype == jnp.bfloat16 and out_bf.shape == (B, L, D)
    assert jnp.allclose(out_bf.astype(jnp.float32), ref_bf, atol=6e-2, rtol=6e-2), \
        float(jnp.max(jnp.abs(out_bf.astype(jnp.float32) - ref_bf)))

    # 4) Hidden dim not a multiple of the H tile: exercises the zero-padded
    #    weight path (padded slice contributes exactly 0).
    H2 = 320
    kw1b, kb1b, kw2b = jax.random.split(kw1, 3)
    lim1b = 1.0 / (D ** 0.5)
    lim2b = 1.0 / (H2 ** 0.5)
    w1b = jax.random.uniform(kw1b, (D, H2), minval=-lim1b, maxval=lim1b, dtype=jnp.float32)
    b1b = jax.random.uniform(kb1b, (H2,), minval=-lim1b, maxval=lim1b, dtype=jnp.float32)
    w2b = jax.random.uniform(kw2b, (H2, D), minval=-lim2b, maxval=lim2b, dtype=jnp.float32)
    ref_h = _reference(x, ada_scale, ada_bias, w1b, b1b, w2b, b2)
    out_h = positionwise_ffn(x, ada_scale, ada_bias, w1b, b1b, w2b, b2, th=128)
    out_h = jax.block_until_ready(out_h)
    assert jnp.allclose(out_h, ref_h, atol=3e-2, rtol=3e-2), \
        float(jnp.max(jnp.abs(out_h - ref_h)))

    print("KERNEL_OK")
</pallas_src>

<mosaic_0001>
module attributes {stable_mosaic.version = 11 : i64} {
  func.func @_ffn_kernel(%arg0: i32, %arg1: i32, %arg2: memref<8x128xf32, #tpu.memory_space<vmem>>, %arg3: memref<1x128xf32, #tpu.memory_space<vmem>>, %arg4: memref<1x128xf32, #tpu.memory_space<vmem>>, %arg5: memref<128x256xbf16, #tpu.memory_space<vmem>>, %arg6: memref<1x256xf32, #tpu.memory_space<vmem>>, %arg7: memref<256x128xbf16, #tpu.memory_space<vmem>>, %arg8: memref<1x128xf32, #tpu.memory_space<vmem>>, %arg9: memref<8x128xf32, #tpu.memory_space<vmem>>, %arg10: memref<8x128xbf16, #tpu.memory_space<vmem>>) attributes {dimension_semantics = [#tpu.dimension_semantics<parallel>, #tpu.dimension_semantics<arbitrary>], iteration_bounds = array<i64: 2, 1>, scalar_prefetch = 0 : i64, scratch_operands = 1 : i64, tpu.core_type = #tpu.core_type<tc>, window_params = [{transform_indices = @transform_0, window_bounds = array<i64: 8, 128>}, {pipeline_mode = #tpu.pipeline_mode<synchronous>, transform_indices = @transform_1, window_bounds = array<i64: 1, 128>}, {pipeline_mode = #tpu.pipeline_mode<synchronous>, transform_indices = @transform_2, window_bounds = array<i64: 1, 128>}, {transform_indices = @transform_3, window_bounds = array<i64: 128, 256>}, {transform_indices = @transform_4, window_bounds = array<i64: 1, 256>}, {transform_indices = @transform_5, window_bounds = array<i64: 256, 128>}, {pipeline_mode = #tpu.pipeline_mode<synchronous>, transform_indices = @transform_6, window_bounds = array<i64: 1, 128>}, {transform_indices = @transform_7, window_bounds = array<i64: 8, 128>}]} {
    %c0_i32 = arith.constant 0 : i32
    %0 = arith.cmpi eq, %arg1, %c0_i32 : i32
    %1 = arith.extui %0 : i1 to i32
    %c0_i32_0 = arith.constant 0 : i32
    %2 = arith.cmpi ne, %1, %c0_i32_0 : i32
    scf.if %2 {
      %c0_16 = arith.constant 0 : index
      %c0_17 = arith.constant 0 : index
      %20 = vector.load %arg3[%c0_16, %c0_17] : memref<1x128xf32, #tpu.memory_space<vmem>>, vector<1x128xf32>
      %c0_18 = arith.constant 0 : index
      %c0_19 = arith.constant 0 : index
      %21 = vector.load %arg2[%c0_18, %c0_19] : memref<8x128xf32, #tpu.memory_space<vmem>>, vector<8x128xf32>
      %22 = vector.broadcast %20 : vector<1x128xf32> to vector<8x128xf32>
      %23 = arith.mulf %22, %21 : vector<8x128xf32>
      %c0_20 = arith.constant 0 : index
      %c0_21 = arith.constant 0 : index
      %24 = vector.load %arg4[%c0_20, %c0_21] : memref<1x128xf32, #tpu.memory_space<vmem>>, vector<1x128xf32>
      %25 = vector.broadcast %24 : vector<1x128xf32> to vector<8x128xf32>
      %26 = arith.addf %23, %25 : vector<8x128xf32>
      %27 = arith.truncf %26 : vector<8x128xf32> to vector<8x128xbf16>
      %c0_22 = arith.constant 0 : index
      %c0_23 = arith.constant 0 : index
      %28 = vector.load %arg10[%c0_22, %c0_23] : memref<8x128xbf16, #tpu.memory_space<vmem>>, vector<8x128xbf16>
      tpu.vector_store %arg10[%c0_22, %c0_23], %27 {strides = array<i32>} : memref<8x128xbf16, #tpu.memory_space<vmem>>, vector<8x128xbf16>,
      %cst_24 = arith.constant 0.000000e+00 : f32
      %29 = vector.broadcast %cst_24 : f32 to vector<8x128xf32>
      %c0_25 = arith.constant 0 : index
      %c0_26 = arith.constant 0 : index
      %30 = vector.load %arg9[%c0_25, %c0_26] : memref<8x128xf32, #tpu.memory_space<vmem>>, vector<8x128xf32>
      tpu.vector_store %arg9[%c0_25, %c0_26], %29 {strides = array<i32>} : memref<8x128xf32, #tpu.memory_space<vmem>>, vector<8x128xf32>,
    } else {
    }
    %c0 = arith.constant 0 : index
    %c0_1 = arith.constant 0 : index
    %3 = vector.load %arg10[%c0, %c0_1] : memref<8x128xbf16, #tpu.memory_space<vmem>>, vector<8x128xbf16>
    %c0_2 = arith.constant 0 : index
    %c0_3 = arith.constant 0 : index
    %4 = vector.load %arg5[%c0_2, %c0_3] : memref<128x256xbf16, #tpu.memory_space<vmem>>, vector<128x256xbf16>
    %cst = arith.constant dense<0.000000e+00> : vector<8x256xf32>
    %5 = tpu.matmul %3, %4, %cst {dimension_numbers = #tpu.dot_dimension_numbers<[1], [0], [0], [1], [0, 0, 1, 1], [], []>} : vector<8x128xbf16>, vector<128x256xbf16>, vector<8x256xf32> -> vector<8x256xf32>
    %c0_4 = arith.constant 0 : index
    %c0_5 = arith.constant 0 : index
    %6 = vector.load %arg6[%c0_4, %c0_5] : memref<1x256xf32, #tpu.memory_space<vmem>>, vector<1x256xf32>
    %7 = vector.broadcast %6 : vector<1x256xf32> to vector<8x256xf32>
    %8 = arith.addf %5, %7 : vector<8x256xf32>
    %cst_6 = arith.constant 0.000000e+00 : f32
    %9 = vector.broadcast %cst_6 : f32 to vector<8x256xf32>
    %10 = arith.maximumf %8, %9 : vector<8x256xf32>
    %c0_7 = arith.constant 0 : index
    %c0_8 = arith.constant 0 : index
    %11 = vector.load %arg9[%c0_7, %c0_8] : memref<8x128xf32, #tpu.memory_space<vmem>>, vector<8x128xf32>
    %12 = arith.truncf %10 : vector<8x256xf32> to vector<8x256xbf16>
    %c0_9 = arith.constant 0 : index
    %c0_10 = arith.constant 0 : index
    %13 = vector.load %arg7[%c0_9, %c0_10] : memref<256x128xbf16, #tpu.memory_space<vmem>>, vector<256x128xbf16>
    %cst_11 = arith.constant dense<0.000000e+00> : vector<8x128xf32>
    %14 = tpu.matmul %12, %13, %cst_11 {dimension_numbers = #tpu.dot_dimension_numbers<[1], [0], [0], [1], [0, 0, 1, 1], [], []>} : vector<8x256xbf16>, vector<256x128xbf16>, vector<8x128xf32> -> vector<8x128xf32>
    %15 = arith.addf %11, %14 : vector<8x128xf32>
    %c0_12 = arith.constant 0 : index
    %c0_13 = arith.constant 0 : index
    %16 = vector.load %arg9[%c0_12, %c0_13] : memref<8x128xf32, #tpu.memory_space<vmem>>, vector<8x128xf32>
    tpu.vector_store %arg9[%c0_12, %c0_13], %15 {strides = array<i32>} : memref<8x128xf32, #tpu.memory_space<vmem>>, vector<8x128xf32>,
    %c0_i32_14 = arith.constant 0 : i32
    %17 = arith.cmpi eq, %arg1, %c0_i32_14 : i32
    %18 = arith.extui %17 : i1 to i32
    %c0_i32_15 = arith.constant 0 : i32
    %19 = arith.cmpi ne, %18, %c0_i32_15 : i32
    scf.if %19 {
      %c0_16 = arith.constant 0 : index
      %c0_17 = arith.constant 0 : index
      %20 = vector.load %arg9[%c0_16, %c0_17] : memref<8x128xf32, #tpu.memory_space<vmem>>, vector<8x128xf32>
      %c0_18 = arith.constant 0 : index
      %c0_19 = arith.constant 0 : index
      %21 = vector.load %arg8[%c0_18, %c0_19] : memref<1x128xf32, #tpu.memory_space<vmem>>, vector<1x128xf32>
      %22 = vector.broadcast %21 : vector<1x128xf32> to vector<8x128xf32>
      %23 = arith.addf %20, %22 : vector<8x128xf32>
      %c0_20 = arith.constant 0 : index
      %c0_21 = arith.constant 0 : index
      %24 = vector.load %arg9[%c0_20, %c0_21] : memref<8x128xf32, #tpu.memory_space<vmem>>, vector<8x128xf32>
      tpu.vector_store %arg9[%c0_20, %c0_21], %23 {strides = array<i32>} : memref<8x128xf32, #tpu.memory_space<vmem>>, vector<8x128xf32>,
    } else {
    }
    return
  }
  func.func @transform_0(%arg0: i32, %arg1: i32) -> (i32, i32) {
    %c0_i32 = arith.constant 0 : i32
    %c0_i32_0 = arith.constant 0 : i32
    return %arg0, %c0_i32 : i32, i32
  }
  func.func @transform_1(%arg0: i32, %arg1: i32) -> (i32, i32) {
    %c0_i32 = arith.constant 0 : i32
    %c0_i32_0 = arith.constant 0 : i32
    %c0_i32_1 = arith.constant 0 : i32
    return %c0_i32, %c0_i32_0 : i32, i32
  }
  func.func @transform_2(%arg0: i32, %arg1: i32) -> (i32, i32) {
    %c0_i32 = arith.constant 0 : i32
    %c0_i32_0 = arith.constant 0 : i32
    %c0_i32_1 = arith.constant 0 : i32
    return %c0_i32, %c0_i32_0 : i32, i32
  }
  func.func @transform_3(%arg0: i32, %arg1: i32) -> (i32, i32) {
    %c0_i32 = arith.constant 0 : i32
    %c0_i32_0 = arith.constant 0 : i32
    return %c0_i32, %arg1 : i32, i32
  }
  func.func @transform_4(%arg0: i32, %arg1: i32) -> (i32, i32) {
    %c0_i32 = arith.constant 0 : i32
    %c0_i32_0 = arith.constant 0 : i32
    return %c0_i32, %arg1 : i32, i32
  }
  func.func @transform_5(%arg0: i32, %arg1: i32) -> (i32, i32) {
    %c0_i32 = arith.constant 0 : i32
    %c0_i32_0 = arith.constant 0 : i32
    return %arg1, %c0_i32 : i32, i32
  }
  func.func @transform_6(%arg0: i32, %arg1: i32) -> (i32, i32) {
    %c0_i32 = arith.constant 0 : i32
    %c0_i32_0 = arith.constant 0 : i32
    %c0_i32_1 = arith.constant 0 : i32
    return %c0_i32, %c0_i32_0 : i32, i32
  }
  func.func @transform_7(%arg0: i32, %arg1: i32) -> (i32, i32) {
    %c0_i32 = arith.constant 0 : i32
    %c0_i32_0 = arith.constant 0 : i32
    return %arg0, %c0_i32 : i32, i32
  }
}

</mosaic_0001>

<llo_original>
// kernel: tpu_custom_call.1
$region0: #{tpu_custom_call.1}
  #allocation0 [shape = 'u32[]', space=smem, size = 0x4, offset = 0x4, fixed_abs, tag = 'smem constant byte address 0x4 - core index']
  #allocation1 [shape = 'u32[144,128]{1,0:T(1,128)}', space=vmem, size = 0x12000, scoped, tag = 'internal scratch']
  #allocation2 [shape = 'bf16[8,128]{1,0:T(8,128)(2,1)}', space=vmem, size = 0x800, scoped, tag = 'scratch operand']
  %s0 = inlined_call_operand.hbm [shape: f32[16,128], index: 0, kind: input, shape index: {}]
  %s1 = inlined_call_operand.vmem [shape: f32[1,128], index: 1, kind: input, shape index: {}]
  %s2 = inlined_call_operand.vmem [shape: f32[1,128], index: 2, kind: input, shape index: {}]
  %s3 = inlined_call_operand.hbm [shape: bf16[128,256], index: 3, kind: input, shape index: {}]
  %s4 = inlined_call_operand.vmem [shape: f32[1,256], index: 4, kind: input, shape index: {}]
  %s5 = inlined_call_operand.hbm [shape: bf16[256,128], index: 5, kind: input, shape index: {}]
  %s6 = inlined_call_operand.vmem [shape: f32[1,128], index: 6, kind: input, shape index: {}]
  %s7 = inlined_call_operand.hbm [shape: f32[16,128], index: 7, kind: output, shape index: {}]
  %s8 = sld [smem:[#allocation0]]
  $region81: #{tpu_custom_call.1} parent=0
    _
  %s10 = ssub.s32 1, %s8
  %s11 = scalar_select 0, %s10, %s8
  $region1: #{tpu_custom_call.1} parent=0
    #allocation3 [shape = 'u8[8192]{0}', space=vmem, size = 0x2000, scoped, tag = 'input window, operand 0']
    #allocation4 [shape = 's32[2]{0}', space=sflag, size = 0x8, scoped, tag = 'scoped memory for tpu_custom_call.1']
    #allocation5 [shape = 's32[2]{0}', space=sflag, size = 0x8, scoped, tag = 'scoped memory for tpu_custom_call.1']
    #allocation6 [shape = 'u8[65536]{0}', space=vmem, size = 0x10000, scoped, tag = 'input window, operand 3, single buffered']
    #allocation7 [shape = 's32[1]{0}', space=sflag, size = 0x4, scoped, tag = 'scoped memory for tpu_custom_call.1']
    #allocation8 [shape = 'u8[65536]{0}', space=vmem, size = 0x10000, scoped, tag = 'input window, operand 5, single buffered']
    #allocation9 [shape = 'u8[8192]{0}', space=vmem, size = 0x2000, scoped, tag = 'output window, operand 0']
    %12 = vsyncpa [#allocation4], 0
    %s13 = scalar_lea.sflag [#allocation4], 1
    %14 = vsyncpa %s13, 0
    %15 = vsyncpa [#allocation7], 0
    %16 = vsyncpa [#allocation5], 0
    %s17 = scalar_lea.sflag [#allocation5], 1
    %18 = vsyncpa %s17, 0
    loop: start=0, step=1, limit=4
    $region2: #{tpu_custom_call.1} parent=1 // loop_pre_header
      _
    $region3: #{tpu_custom_call.1} parent=1 // loop_header
      %s20 = sphi 0, %s24
      %p21 = scmp.ge.s32.totalorder %s20, 4
      %s27 = sphi 0, %s39
      %s28 = sphi 0, %s35
      %s29 = sphi 0, %s27
      %s30 = sphi 0, %s28
      %s31 = sphi 0, %s29
      %s32 = sphi 0, %s30
      %s42 = sphi 0, %s44
      %s45 = sphi 0, %s42
      %s46 = sphi 0, %s45
      %s62 = sphi 0, %s46
      %s66 = sphi 0, %s66
      %s68 = sphi 0, %s66
      %s69 = sphi 0, %s68
      %s83 = sphi 0, %s69
      %s87 = sphi 0, %s87
      %s89 = sphi 0, %s87
      %s90 = sphi 0, %s89
      %s104 = sphi 0, %s90
      %s110 = sphi 0, %s112
      %s113 = sphi 0, %s110
      %s114 = sphi 0, %s113
      %s130 = sphi 0, %s114
      %s136 = sphi 0, %s138
      %s139 = sphi 0, %s136
      %s140 = sphi 0, %s139
      %s156 = sphi 0, %s140
      %s162 = sphi 0, %s164
      %s165 = sphi 0, %s162
      %s166 = sphi 0, %s165
      %s182 = sphi 0, %s166
      %s186 = sphi 0, %s186
      %s188 = sphi 0, %s186
      %s189 = sphi 0, %s188
      %s203 = sphi 0, %s189
      %s209 = sphi 0, %s211
      %s212 = sphi 0, %s209
      %s213 = sphi 0, %s212
      %s229 = sphi 0, %s213
    $region4: #{tpu_custom_call.1} parent=1 // loop_header_branch
      %23 = sbr.rel (%p21) target = $region8
    $region5: #{tpu_custom_call.1} parent=1 // loop_body
      %s25 = ssub.s32 %s20, 1
      %s26 = ssub.s32 %s20, 2
      %s33 = sadd.s32 1, %s28
      %p34 = scmp.ge.s32.totalorder %s33, 1
      %s35 = scalar_select %p34, 0, %s33
      %s36 = sadd.s32 1, %s27
      %s37 = scalar_select %p34, %s36, %s27
      %p38 = scmp.ge.s32.totalorder %s37, 2
      %s39 = scalar_select %p38, 0, %s37
      %s40 = ssub.s32 %s27, %s39
      %p41 = scmp.eq.s32.totalorder %s40, 0
      %s43 = sadd.s32 %s42, 1
      %s44 = scalar_select %p41, %s42, %s43
      %p47 = pneg %p41
      %p48 = scmp.eq.s32.totalorder %s20, 1
      %p49 = por %p47, %p48
      %p50 = scmp.ne.s32.totalorder %s42, %s45
      %p51 = scmp.eq.s32.totalorder %s20, 0
      %p52 = por %p50, %p51
      %p53 = scmp.ne.s32.totalorder %s42, %s45
      %p54 = scmp.eq.s32.totalorder %s25, 1
      %p55 = por %p53, %p54
      %p56 = scmp.ne.s32.totalorder %s45, %s46
      %p57 = scmp.eq.s32.totalorder %s25, 0
      %p58 = por %p56, %p57
      %p59 = scmp.ne.s32.totalorder %s45, %s46
      %p60 = scmp.eq.s32.totalorder %s26, 1
      %p61 = por %p59, %p60
      %p63 = scmp.ne.s32.totalorder %s46, %s62
      %p64 = scmp.eq.s32.totalorder %s26, 0
      %p65 = por %p63, %p64
      %s67 = sadd.s32 %s66, 1
      %p70 = scmp.eq.s32.totalorder %s20, 1
      %p71 = scmp.ne.s32.totalorder %s66, %s68
      %p72 = scmp.eq.s32.totalorder %s20, 0
      %p73 = por %p71, %p72
      %p74 = scmp.ne.s32.totalorder %s66, %s68
      %p75 = scmp.eq.s32.totalorder %s25, 1
      %p76 = por %p74, %p75
      %p77 = scmp.ne.s32.totalorder %s68, %s69
      %p78 = scmp.eq.s32.totalorder %s25, 0
      %p79 = por %p77, %p78
      %p80 = scmp.ne.s32.totalorder %s68, %s69
      %p81 = scmp.eq.s32.totalorder %s26, 1
      %p82 = por %p80, %p81
      %p84 = scmp.ne.s32.totalorder %s69, %s83
      %p85 = scmp.eq.s32.totalorder %s26, 0
      %p86 = por %p84, %p85
      %s88 = sadd.s32 %s87, 1
      %p91 = scmp.eq.s32.totalorder %s20, 1
      %p92 = scmp.ne.s32.totalorder %s87, %s89
      %p93 = scmp.eq.s32.totalorder %s20, 0
      %p94 = por %p92, %p93
      %p95 = scmp.ne.s32.totalorder %s87, %s89
      %p96 = scmp.eq.s32.totalorder %s25, 1
      %p97 = por %p95, %p96
      %p98 = scmp.ne.s32.totalorder %s89, %s90
      %p99 = scmp.eq.s32.totalorder %s25, 0
      %p100 = por %p98, %p99
      %p101 = scmp.ne.s32.totalorder %s89, %s90
      %p102 = scmp.eq.s32.totalorder %s26, 1
      %p103 = por %p101, %p102
      %p105 = scmp.ne.s32.totalorder %s90, %s104
      %p106 = scmp.eq.s32.totalorder %s26, 0
      %p107 = por %p105, %p106
      %s108 = ssub.s32 %s28, %s35
      %p109 = scmp.eq.s32.totalorder %s108, 0
      %s111 = sadd.s32 %s110, 1
      %s112 = scalar_select %p109, %s110, %s111
      %p115 = pneg %p109
      %p116 = scmp.eq.s32.totalorder %s20, 1
      %p117 = por %p115, %p116
      %p118 = scmp.ne.s32.totalorder %s110, %s113
      %p119 = scmp.eq.s32.totalorder %s20, 0
      %p120 = por %p118, %p119
      %p121 = scmp.ne.s32.totalorder %s110, %s113
      %p122 = scmp.eq.s32.totalorder %s25, 1
      %p123 = por %p121, %p122
      %p124 = scmp.ne.s32.totalorder %s113, %s114
      %p125 = scmp.eq.s32.totalorder %s25, 0
      %p126 = por %p124, %p125
      %p127 = scmp.ne.s32.totalorder %s113, %s114
      %p128 = scmp.eq.s32.totalorder %s26, 1
      %p129 = por %p127, %p128
      %p131 = scmp.ne.s32.totalorder %s114, %s130
      %p132 = scmp.eq.s32.totalorder %s26, 0
      %p133 = por %p131, %p132
      %s134 = ssub.s32 %s28, %s35
      %p135 = scmp.eq.s32.totalorder %s134, 0
      %s137 = sadd.s32 %s136, 1
      %s138 = scalar_select %p135, %s136, %s137
      %p141 = pneg %p135
      %p142 = scmp.eq.s32.totalorder %s20, 1
      %p143 = por %p141, %p142
      %p144 = scmp.ne.s32.totalorder %s136, %s139
      %p145 = scmp.eq.s32.totalorder %s20, 0
      %p146 = por %p144, %p145
      %p147 = scmp.ne.s32.totalorder %s136, %s139
      %p148 = scmp.eq.s32.totalorder %s25, 1
      %p149 = por %p147, %p148
      %p150 = scmp.ne.s32.totalorder %s139, %s140
      %p151 = scmp.eq.s32.totalorder %s25, 0
      %p152 = por %p150, %p151
      %p153 = scmp.ne.s32.totalorder %s139, %s140
      %p154 = scmp.eq.s32.totalorder %s26, 1
      %p155 = por %p153, %p154
      %p157 = scmp.ne.s32.totalorder %s140, %s156
      %p158 = scmp.eq.s32.totalorder %s26, 0
      %p159 = por %p157, %p158
      %s160 = ssub.s32 %s28, %s35
      %p161 = scmp.eq.s32.totalorder %s160, 0
      %s163 = sadd.s32 %s162, 1
      %s164 = scalar_select %p161, %s162, %s163
      %p167 = pneg %p161
      %p168 = scmp.eq.s32.totalorder %s20, 1
      %p169 = por %p167, %p168
      %p170 = scmp.ne.s32.totalorder %s162, %s165
      %p171 = scmp.eq.s32.totalorder %s20, 0
      %p172 = por %p170, %p171
      %p173 = scmp.ne.s32.totalorder %s162, %s165
      %p174 = scmp.eq.s32.totalorder %s25, 1
      %p175 = por %p173, %p174
      %p176 = scmp.ne.s32.totalorder %s165, %s166
      %p177 = scmp.eq.s32.totalorder %s25, 0
      %p178 = por %p176, %p177
      %p179 = scmp.ne.s32.totalorder %s165, %s166
      %p180 = scmp.eq.s32.totalorder %s26, 1
      %p181 = por %p179, %p180
      %p183 = scmp.ne.s32.totalorder %s166, %s182
      %p184 = scmp.eq.s32.totalorder %s26, 0
      %p185 = por %p183, %p184
      %s187 = sadd.s32 %s186, 1
      %p190 = scmp.eq.s32.totalorder %s20, 1
      %p191 = scmp.ne.s32.totalorder %s186, %s188
      %p192 = scmp.eq.s32.totalorder %s20, 0
      %p193 = por %p191, %p192
      %p194 = scmp.ne.s32.totalorder %s186, %s188
      %p195 = scmp.eq.s32.totalorder %s25, 1
      %p196 = por %p194, %p195
      %p197 = scmp.ne.s32.totalorder %s188, %s189
      %p198 = scmp.eq.s32.totalorder %s25, 0
      %p199 = por %p197, %p198
      %p200 = scmp.ne.s32.totalorder %s188, %s189
      %p201 = scmp.eq.s32.totalorder %s26, 1
      %p202 = por %p200, %p201
      %p204 = scmp.ne.s32.totalorder %s189, %s203
      %p205 = scmp.eq.s32.totalorder %s26, 0
      %p206 = por %p204, %p205
      %s207 = ssub.s32 %s27, %s39
      %p208 = scmp.eq.s32.totalorder %s207, 0
      %s210 = sadd.s32 %s209, 1
      %s211 = scalar_select %p208, %s209, %s210
      %p214 = pneg %p208
      %p215 = scmp.eq.s32.totalorder %s20, 1
      %p216 = por %p214, %p215
      %p217 = scmp.ne.s32.totalorder %s209, %s212
      %p218 = scmp.eq.s32.totalorder %s20, 0
      %p219 = por %p217, %p218
      %p220 = scmp.ne.s32.totalorder %s209, %s212
      %p221 = scmp.eq.s32.totalorder %s25, 1
      %p222 = por %p220, %p221
      %p223 = scmp.ne.s32.totalorder %s212, %s213
      %p224 = scmp.eq.s32.totalorder %s25, 0
      %p225 = por %p223, %p224
      %p226 = scmp.ne.s32.totalorder %s212, %s213
      %p227 = scmp.eq.s32.totalorder %s26, 1
      %p228 = por %p226, %p227
      %p230 = scmp.ne.s32.totalorder %s213, %s229
      %p231 = scmp.eq.s32.totalorder %s26, 0
      %p232 = por %p230, %p231
      %p233 = scmp.le.s32.totalorder 1, %s20
      %p234 = scmp.lt.s32.totalorder %s20, 3
      %p235 = pnand %p233, %p234
      %p236 = pneg %p235
      // Predicated region
      $region9: #{tpu_custom_call.1} parent=5 // pred_check
        _
      $region10: #{tpu_custom_call.1} parent=5 // pred_check_branch
        %238 = sbr.rel (%p235) target = $region12
      $region11: #{tpu_custom_call.1} parent=5 // pred_region
        %s239 = ssub.s32 %s20, 1
        // Predicated region
        $region13: #{tpu_custom_call.1} parent=11 // pred_check
          %p240 = pneg %p79
        $region14: #{tpu_custom_call.1} parent=11 // pred_check_branch
          %242 = sbr.rel (%p240) target = $region16
        $region15: #{tpu_custom_call.1} parent=11 // pred_region
          _
        $region16: #{tpu_custom_call.1} parent=11 // pred_fallthru
          _
        // Predicated region
        $region17: #{tpu_custom_call.1} parent=11 // pred_check
          %p243 = pneg %p100
        $region18: #{tpu_custom_call.1} parent=11 // pred_check_branch
          %245 = sbr.rel (%p243) target = $region20
        $region19: #{tpu_custom_call.1} parent=11 // pred_region
          _
        $region20: #{tpu_custom_call.1} parent=11 // pred_fallthru
          _
        // Predicated region
        $region21: #{tpu_custom_call.1} parent=11 // pred_check
          %p246 = pneg %p126
        $region22: #{tpu_custom_call.1} parent=11 // pred_check_branch
          %248 = sbr.rel (%p246) target = $region24
        $region23: #{tpu_custom_call.1} parent=11 // pred_region
          %s249 = smul.u32 2, %s30
          %s251 = ssub.s32 2048, 2048
          %252 = vsyncadd [#allocation7], %s251
          %s253 = smul.addr %s249, 64
          %s254 = scalar_lea.hbm %s3, %s253
          %s255 = sshll.u32 [#allocation6], 4
          %s256 = int_to_ptr.vmem [resolvable:$true] %s255
          %261 = dma.hbm_to_vmem [thread:$0]  %s254, 2048, %s256, [#allocation7], 128, 128, 8
        $region24: #{tpu_custom_call.1} parent=11 // pred_fallthru
          _
        // Predicated region
        $region25: #{tpu_custom_call.1} parent=11 // pred_check
          %p262 = pneg %p152
        $region26: #{tpu_custom_call.1} parent=11 // pred_check_branch
          %264 = sbr.rel (%p262) target = $region28
        $region27: #{tpu_custom_call.1} parent=11 // pred_region
          %s265 = smul.u32 2, %s30
          %p266 = scmp.lt.s32.totalorder %s265, 1
          %s267 = scalar_select %p266, %s265, 1
          %s268 = scalar_lea.vmem %s4, %s267
          %s269 = smul.u32 2, %s30
        $region28: #{tpu_custom_call.1} parent=11 // pred_fallthru
          _
        // Predicated region
        $region29: #{tpu_custom_call.1} parent=11 // pred_check
          %p270 = pneg %p178
        $region30: #{tpu_custom_call.1} parent=11 // pred_check_branch
          %272 = sbr.rel (%p270) target = $region32
        $region31: #{tpu_custom_call.1} parent=11 // pred_region
          %s273 = smul.u32 32, %s30
          %s275 = ssub.s32 2048, 2048
          %276 = vsyncadd [#allocation7], %s275
          %s277 = smul.addr %s273, 64
          %s278 = scalar_lea.hbm %s5, %s277
          %s279 = sshll.u32 [#allocation8], 4
          %s280 = int_to_ptr.vmem [resolvable:$true] %s279
          %285 = dma.hbm_to_vmem [thread:$0]  %s278, 2048, %s280, [#allocation7], 64, 64, 4
        $region32: #{tpu_custom_call.1} parent=11 // pred_fallthru
          _
        // Predicated region
        $region33: #{tpu_custom_call.1} parent=11 // pred_check
          %p286 = pneg %p199
        $region34: #{tpu_custom_call.1} parent=11 // pred_check_branch
          %288 = sbr.rel (%p286) target = $region36
        $region35: #{tpu_custom_call.1} parent=11 // pred_region
          _
        $region36: #{tpu_custom_call.1} parent=11 // pred_fallthru
          _
      $region12: #{tpu_custom_call.1} parent=5 // pred_fallthru
        _
      %p289 = scmp.lt.s32.totalorder %s20, 2
      // Predicated region
      $region37: #{tpu_custom_call.1} parent=5 // pred_check
        %p290 = pneg %p289
      $region38: #{tpu_custom_call.1} parent=5 // pred_check_branch
        %292 = sbr.rel (%p290) target = $region40
      $region39: #{tpu_custom_call.1} parent=5 // pred_region
        // Predicated region
        $region41: #{tpu_custom_call.1} parent=39 // pred_check
          %p293 = pneg %p52
        $region42: #{tpu_custom_call.1} parent=39 // pred_check_branch
          %295 = sbr.rel (%p293) target = $region44
        $region43: #{tpu_custom_call.1} parent=39 // pred_region
          %s296 = sand.u32 %s42, 1
          %s297 = scalar_lea.sflag [#allocation4], %s296
          %s298 = sand.u32 %s42, 1
          %s299 = smul.addr %s298, 8
          %s300 = scalar_lea.vmem [#allocation3], %s299
          %s302 = ssub.s32 128, 128
          %303 = vsyncadd %s297, %s302
          %s304 = smul.addr %s27, 128
          %s305 = scalar_lea.hbm %s0, %s304
          %s307 = sshll.u32 %s300, 4
          %s308 = int_to_ptr.vmem [resolvable:$true] %s307
          %310 = dma.hbm_to_vmem [thread:$0]  %s305, 128, %s308, %s297
        $region44: #{tpu_custom_call.1} parent=39 // pred_fallthru
          _
      $region40: #{tpu_custom_call.1} parent=5 // pred_fallthru
        _
      %p311 = scmp.le.s32.totalorder 1, %s20
      %p312 = scmp.lt.s32.totalorder %s20, 3
      %p313 = pnand %p311, %p312
      %p314 = pneg %p313
      // Predicated region
      $region45: #{tpu_custom_call.1} parent=5 // pred_check
        _
      $region46: #{tpu_custom_call.1} parent=5 // pred_check_branch
        %316 = sbr.rel (%p313) target = $region48
      $region47: #{tpu_custom_call.1} parent=5 // pred_region
        %s317 = ssub.s32 %s20, 1
        %s318 = sand.u32 %s45, 1
        %s319 = scalar_lea.sflag [#allocation4], %s318
        %s320 = sand.u32 %s45, 1
        %s321 = smul.addr %s320, 8
        %s322 = scalar_lea.vmem [#allocation3], %s321
        // Predicated region
        $region49: #{tpu_custom_call.1} parent=47 // pred_check
          %p323 = pneg %p58
        $region50: #{tpu_custom_call.1} parent=47 // pred_check_branch
          %325 = sbr.rel (%p323) target = $region52
        $region51: #{tpu_custom_call.1} parent=47 // pred_region
          %326 = dma.done %s319, 128
        $region52: #{tpu_custom_call.1} parent=47 // pred_fallthru
          _
        // Predicated region
        $region53: #{tpu_custom_call.1} parent=47 // pred_check
          %p327 = pneg %p126
        $region54: #{tpu_custom_call.1} parent=47 // pred_check_branch
          %329 = sbr.rel (%p327) target = $region56
        $region55: #{tpu_custom_call.1} parent=47 // pred_region
          %330 = dma.done [#allocation7], 2048
        $region56: #{tpu_custom_call.1} parent=47 // pred_fallthru
          _
        // Predicated region
        $region57: #{tpu_custom_call.1} parent=47 // pred_check
          %p331 = pneg %p178
        $region58: #{tpu_custom_call.1} parent=47 // pred_check_branch
          %333 = sbr.rel (%p331) target = $region60
        $region59: #{tpu_custom_call.1} parent=47 // pred_region
          %334 = dma.done [#allocation7], 2048
        $region60: #{tpu_custom_call.1} parent=47 // pred_fallthru
          _
        %s335 = sand.u32 %s45, 1
        %s336 = scalar_lea.sflag [#allocation4], %s335
        %s337 = sand.u32 %s45, 1
        %s338 = smul.addr %s337, 8
        %s339 = scalar_lea.vmem [#allocation3], %s338
        %p340 = pneg %p58
        %p341 = pneg %p55
        %p342 = pneg %p79
        %p343 = pneg %p76
        %p344 = pneg %p100
        %p345 = pneg %p97
        %p346 = pneg %p126
        %p347 = pneg %p123
        %s348 = smul.u32 2, %s30
        %p349 = scmp.lt.s32.totalorder %s348, 1
        %s350 = scalar_select %p349, %s348, 1
        %s351 = scalar_lea.vmem %s4, %s350
        %p352 = pneg %p152
        %p353 = pneg %p149
        %p354 = pneg %p178
        %p355 = pneg %p175
        %p356 = pneg %p199
        %p357 = pneg %p196
        %p358 = pneg %p225
        %p359 = pneg %p222
        %s360 = sand.u32 %s212, 1
        %s361 = scalar_lea.sflag [#allocation5], %s360
        %s362 = sand.u32 %s212, 1
        %s363 = smul.addr %s362, 8
        %s364 = scalar_lea.vmem [#allocation9], %s363
        %s365 = smul.u32 2, %s30
        %s366 = smul.u32 2, %s30
        %p367 = scmp.lt.s32.totalorder %s366, 1
        %s368 = scalar_select %p367, %s366, 1
        %s369 = scalar_lea.vmem %s4, %s368
        %s370 = smul.u32 2, %s30
        %s371 = smul.u32 32, %s30
        %p373 = scmp.eq.s32.totalorder %s30, 0
        // Predicated region
        $region61: #{tpu_custom_call.1} parent=47 // pred_check
          %p374 = pneg %p373
        $region62: #{tpu_custom_call.1} parent=47 // pred_check_branch
          %376 = sbr.rel (%p374) target = $region64
        $region63: #{tpu_custom_call.1} parent=47 // pred_region
          %v377 = vld [vmem:[%s1] sm:$0x1]
          %v378 = vld [vmem:[%s322] sm:$0xff]
          %v380 = vlaneseq
          %v381 = vshrl.u32 %v380, 7
          %v382 = vsub.s32 0, %v381
          %v383 = vrot.slane %v377, %v382
          %v385 = vmul.f32 %v383, %v378
          %v386 = vld [vmem:[%s2] sm:$0x1]
          %v388 = vlaneseq
          %v389 = vshrl.u32 %v388, 7
          %v390 = vsub.s32 0, %v389
          %v391 = vrot.slane %v386, %v390
          %v393 = vadd.f32 %v385, %v391
          %v394 = vpack.c.bf16 %v393, %v393
          %395 = vst [vmem:[#allocation2] sm:$0xf] %v394
          %396 = vst [vmem:[%s364] sm:$0xff] 0.0
        $region64: #{tpu_custom_call.1} parent=47 // pred_fallthru
          _
        %v397 = vld [vmem:[#allocation2] sm:$0xf]
        %v398 = vld [vmem:[#allocation6] sm:$0xff]
        %v399 = vld [vmem:[#allocation6 + $0x8] sm:$0xff]
        %v400 = vld [vmem:[#allocation6 + $0x10] sm:$0xff]
        %v401 = vld [vmem:[#allocation6 + $0x18] sm:$0xff]
        %v402 = vld [vmem:[#allocation6 + $0x20] sm:$0xff]
        %v403 = vld [vmem:[#allocation6 + $0x28] sm:$0xff]
        %v404 = vld [vmem:[#allocation6 + $0x30] sm:$0xff]
        %v405 = vld [vmem:[#allocation6 + $0x38] sm:$0xff]
        %v406 = vld [vmem:[#allocation6 + $0x40] sm:$0xff]
        %v407 = vld [vmem:[#allocation6 + $0x48] sm:$0xff]
        %v408 = vld [vmem:[#allocation6 + $0x50] sm:$0xff]
        %v409 = vld [vmem:[#allocation6 + $0x58] sm:$0xff]
        %v410 = vld [vmem:[#allocation6 + $0x60] sm:$0xff]
        %v411 = vld [vmem:[#allocation6 + $0x68] sm:$0xff]
        %v412 = vld [vmem:[#allocation6 + $0x70] sm:$0xff]
        %v413 = vld [vmem:[#allocation6 + $0x78] sm:$0xff]
        %v414 = vld [vmem:[%s369] sm:$0x3]
        %v416 = vlaneseq
        %v417 = vshrl.u32 %v416, 7
        %v418 = vsub.s32 0, %v417
        %v419 = vrot.slane %v414, %v418
        %v420 = vlaneseq
        %v421 = vshrl.u32 %v420, 7
        %v422 = vsub.s32 1, %v421
        %v423 = vrot.slane %v414, %v422
        %v442 = vunpack.c.l.b16 %v398
        %v443 = vunpack.c.h.b16 %v398
        %v444 = vunpack.c.l.b16 %v399
        %v445 = vunpack.c.h.b16 %v399
        %v446 = vunpack.c.l.b16 %v400
        %v447 = vunpack.c.h.b16 %v400
        %v448 = vunpack.c.l.b16 %v401
        %v449 = vunpack.c.h.b16 %v401
        %v450 = vunpack.c.l.b16 %v402
        %v451 = vunpack.c.h.b16 %v402
        %v452 = vunpack.c.l.b16 %v403
        %v453 = vunpack.c.h.b16 %v403
        %v454 = vunpack.c.l.b16 %v404
        %v455 = vunpack.c.h.b16 %v404
        %v456 = vunpack.c.l.b16 %v405
        %v457 = vunpack.c.h.b16 %v405
        %v458 = vunpack.c.l.b16 %v406
        %v459 = vunpack.c.h.b16 %v406
        %v460 = vunpack.c.l.b16 %v407
        %v461 = vunpack.c.h.b16 %v407
        %v462 = vunpack.c.l.b16 %v408
        %v463 = vunpack.c.h.b16 %v408
        %v464 = vunpack.c.l.b16 %v409
        %v465 = vunpack.c.h.b16 %v409
        %v466 = vunpack.c.l.b16 %v410
        %v467 = vunpack.c.h.b16 %v410
        %v468 = vunpack.c.l.b16 %v411
        %v469 = vunpack.c.h.b16 %v411
        %v470 = vunpack.c.l.b16 %v412
        %v471 = vunpack.c.h.b16 %v412
        %v472 = vunpack.c.l.b16 %v413
        %v473 = vunpack.c.h.b16 %v413
        %v474 = vpack.c.b16 %v444, %v442
        %v475 = vpack.c.b16 %v445, %v443
        %v476 = vpack.c.b16 %v448, %v446
        %v477 = vpack.c.b16 %v449, %v447
        %v478 = vpack.c.b16 %v452, %v450
        %v479 = vpack.c.b16 %v453, %v451
        %v480 = vpack.c.b16 %v456, %v454
        %v481 = vpack.c.b16 %v457, %v455
        %v482 = vpack.c.b16 %v460, %v458
        %v483 = vpack.c.b16 %v461, %v459
        %v484 = vpack.c.b16 %v464, %v462
        %v485 = vpack.c.b16 %v465, %v463
        %v486 = vpack.c.b16 %v468, %v466
        %v487 = vpack.c.b16 %v469, %v467
        %v488 = vpack.c.b16 %v472, %v470
        %v489 = vpack.c.b16 %v473, %v471
        %506 = vmatprep.subr.bf16.mxu0 %v475
        %507 = vmatpush1.bf16.msra.mxu0 %v474
        %508 = vmatprep.subr.bf16.mxu0 %v477
        %509 = vmatpush1.bf16.msra.mxu0 %v476
        %510 = vmatprep.subr.bf16.mxu0 %v479
        %511 = vmatpush1.bf16.msra.mxu0 %v478
        %512 = vmatprep.subr.bf16.mxu0 %v481
        %513 = vmatpush1.bf16.msra.mxu0 %v480
        %514 = vmatprep.subr.bf16.mxu0 %v483
        %515 = vmatpush1.bf16.msra.mxu0 %v482
        %516 = vmatprep.subr.bf16.mxu0 %v485
        %517 = vmatpush1.bf16.msra.mxu0 %v484
        %518 = vmatprep.subr.bf16.mxu0 %v487
        %519 = vmatpush1.bf16.msra.mxu0 %v486
        %520 = vmatprep.subr.bf16.mxu0 %v489
        %521 = vmatpush1.bf16.msra.mxu0 %v488
        %522 = vmatprep.subr.bf16.mxu0 0
        %523 = vmatpush1.bf16.msra.mxu0 0
        %524 = vmatprep.subr.bf16.mxu0 0
        %525 = vmatpush1.bf16.msra.mxu0 0
        %526 = vmatprep.subr.bf16.mxu0 0
        %527 = vmatpush1.bf16.msra.mxu0 0
        %528 = vmatprep.subr.bf16.mxu0 0
        %529 = vmatpush1.bf16.msra.mxu0 0
        %530 = vmatprep.subr.bf16.mxu0 0
        %531 = vmatpush1.bf16.msra.mxu0 0
        %532 = vmatprep.subr.bf16.mxu0 0
        %533 = vmatpush1.bf16.msra.mxu0 0
        %534 = vmatprep.subr.bf16.mxu0 0
        %535 = vmatpush1.bf16.msra.mxu0 0
        %536 = vmatprep.subr.bf16.mxu0 0
        %537 = vmatpush1.bf16.msra.mxu0 0
        %538 = vmatprep.mubr.bf16.mxu0 0
        %539 = vmatmul.mubr.bf16.gmra.mrb[0].mxu0 %v397
        %v540 = vpop.f32.mrb[0].mxu0
        %v541 = vadd.f32 %v419, %v540
        %v542 = vpop.f32.mrb[0].mxu0
        %v543 = vadd.f32 %v423, %v542
        %v544 = vpop.f32.mrb[0].mxu0
        %v545 = vpop.f32.mrb[0].mxu0
        %546 = vdwg.mxu0
        %v547 = vmax.f32 %v541, 0.0
        %v548 = vmax.f32 %v543, 0.0
        %v549 = vld [vmem:[%s364] sm:$0xff]
        %v550 = vpack.c.bf16 %v547, %v547
        %v551 = vpack.c.bf16 %v548, %v548
        %v552 = vld [vmem:[#allocation8] sm:$0xf]
        %v553 = vld [vmem:[#allocation8 + $0x4] sm:$0xf]
        %v554 = vld [vmem:[#allocation8 + $0x8] sm:$0xf]
        %v555 = vld [vmem:[#allocation8 + $0xc] sm:$0xf]
        %v556 = vld [vmem:[#allocation8 + $0x10] sm:$0xf]
        %v557 = vld [vmem:[#allocation8 + $0x14] sm:$0xf]
        %v558 = vld [vmem:[#allocation8 + $0x18] sm:$0xf]
        %v559 = vld [vmem:[#allocation8 + $0x1c] sm:$0xf]
        %v560 = vld [vmem:[#allocation8 + $0x20] sm:$0xf]
        %v561 = vld [vmem:[#allocation8 + $0x24] sm:$0xf]
        %v562 = vld [vmem:[#allocation8 + $0x28] sm:$0xf]
        %v563 = vld [vmem:[#allocation8 + $0x2c] sm:$0xf]
        %v564 = vld [vmem:[#allocation8 + $0x30] sm:$0xf]
        %v565 = vld [vmem:[#allocation8 + $0x34] sm:$0xf]
        %v566 = vld [vmem:[#allocation8 + $0x38] sm:$0xf]
        %v567 = vld [vmem:[#allocation8 + $0x3c] sm:$0xf]
        %v568 = vld [vmem:[#allocation8 + $0x40] sm:$0xf]
        %v569 = vld [vmem:[#allocation8 + $0x44] sm:$0xf]
        %v570 = vld [vmem:[#allocation8 + $0x48] sm:$0xf]
        %v571 = vld [vmem:[#allocation8 + $0x4c] sm:$0xf]
        %v572 = vld [vmem:[#allocation8 + $0x50] sm:$0xf]
        %v573 = vld [vmem:[#allocation8 + $0x54] sm:$0xf]
        %v574 = vld [vmem:[#allocation8 + $0x58] sm:$0xf]
        %v575 = vld [vmem:[#allocation8 + $0x5c] sm:$0xf]
        %v576 = vld [vmem:[#allocation8 + $0x60] sm:$0xf]
        %v577 = vld [vmem:[#allocation8 + $0x64] sm:$0xf]
        %v578 = vld [vmem:[#allocation8 + $0x68] sm:$0xf]
        %v579 = vld [vmem:[#allocation8 + $0x6c] sm:$0xf]
        %v580 = vld [vmem:[#allocation8 + $0x70] sm:$0xf]
        %v581 = vld [vmem:[#allocation8 + $0x74] sm:$0xf]
        %v582 = vld [vmem:[#allocation8 + $0x78] sm:$0xf]
        %v583 = vld [vmem:[#allocation8 + $0x7c] sm:$0xf]
        %v616 = vunpack.c.l.b16 %v552
        %v617 = vunpack.c.l.b16 %v553
        %v618 = vunpack.c.l.b16 %v554
        %v619 = vunpack.c.l.b16 %v555
        %v620 = vunpack.c.l.b16 %v556
        %v621 = vunpack.c.l.b16 %v557
        %v622 = vunpack.c.l.b16 %v558
        %v623 = vunpack.c.l.b16 %v559
        %v624 = vunpack.c.l.b16 %v560
        %v625 = vunpack.c.l.b16 %v561
        %v626 = vunpack.c.l.b16 %v562
        %v627 = vunpack.c.l.b16 %v563
        %v628 = vunpack.c.l.b16 %v564
        %v629 = vunpack.c.l.b16 %v565
        %v630 = vunpack.c.l.b16 %v566
        %v631 = vunpack.c.l.b16 %v567
        %v632 = vunpack.c.l.b16 %v568
        %v633 = vunpack.c.l.b16 %v569
        %v634 = vunpack.c.l.b16 %v570
        %v635 = vunpack.c.l.b16 %v571
        %v636 = vunpack.c.l.b16 %v572
        %v637 = vunpack.c.l.b16 %v573
        %v638 = vunpack.c.l.b16 %v574
        %v639 = vunpack.c.l.b16 %v575
        %v640 = vunpack.c.l.b16 %v576
        %v641 = vunpack.c.l.b16 %v577
        %v642 = vunpack.c.l.b16 %v578
        %v643 = vunpack.c.l.b16 %v579
        %v644 = vunpack.c.l.b16 %v580
        %v645 = vunpack.c.l.b16 %v581
        %v646 = vunpack.c.l.b16 %v582
        %v647 = vunpack.c.l.b16 %v583
        %v648 = vpack.c.b16 %v617, %v616
        %v649 = vpack.c.b16 %v619, %v618
        %v650 = vpack.c.b16 %v621, %v620
        %v651 = vpack.c.b16 %v623, %v622
        %v652 = vpack.c.b16 %v625, %v624
        %v653 = vpack.c.b16 %v627, %v626
        %v654 = vpack.c.b16 %v629, %v628
        %v655 = vpack.c.b16 %v631, %v630
        %v656 = vpack.c.b16 %v633, %v632
        %v657 = vpack.c.b16 %v635, %v634
        %v658 = vpack.c.b16 %v637, %v636
        %v659 = vpack.c.b16 %v639, %v638
        %v660 = vpack.c.b16 %v641, %v640
        %v661 = vpack.c.b16 %v643, %v642
        %v662 = vpack.c.b16 %v645, %v644
        %v663 = vpack.c.b16 %v647, %v646
        %680 = vmatprep.subr.bf16.mxu0 0
        %681 = vmatpush1.bf16.msra.mxu0 %v648
        %682 = vmatprep.subr.bf16.mxu0 0
        %683 = vmatpush1.bf16.msra.mxu0 %v649
        %684 = vmatprep.subr.bf16.mxu0 0
        %685 = vmatpush1.bf16.msra.mxu0 %v650
        %686 = vmatprep.subr.bf16.mxu0 0
        %687 = vmatpush1.bf16.msra.mxu0 %v651
        %688 = vmatprep.subr.bf16.mxu0 0
        %689 = vmatpush1.bf16.msra.mxu0 %v652
        %690 = vmatprep.subr.bf16.mxu0 0
        %691 = vmatpush1.bf16.msra.mxu0 %v653
        %692 = vmatprep.subr.bf16.mxu0 0
        %693 = vmatpush1.bf16.msra.mxu0 %v654
        %694 = vmatprep.subr.bf16.mxu0 0
        %695 = vmatpush1.bf16.msra.mxu0 %v655
        %696 = vmatprep.subr.bf16.mxu0 0
        %697 = vmatpush1.bf16.msra.mxu0 %v656
        %698 = vmatprep.subr.bf16.mxu0 0
        %699 = vmatpush1.bf16.msra.mxu0 %v657
        %700 = vmatprep.subr.bf16.mxu0 0
        %701 = vmatpush1.bf16.msra.mxu0 %v658
        %702 = vmatprep.subr.bf16.mxu0 0
        %703 = vmatpush1.bf16.msra.mxu0 %v659
        %704 = vmatprep.subr.bf16.mxu0 0
        %705 = vmatpush1.bf16.msra.mxu0 %v660
        %706 = vmatprep.subr.bf16.mxu0 0
        %707 = vmatpush1.bf16.msra.mxu0 %v661
        %708 = vmatprep.subr.bf16.mxu0 0
        %709 = vmatpush1.bf16.msra.mxu0 %v662
        %710 = vmatprep.subr.bf16.mxu0 0
        %711 = vmatpush1.bf16.msra.mxu0 %v663
        %712 = vmatprep.mubr.bf16.mxu0 %v551
        %713 = vmatmul.mubr.bf16.gmra.mrb[0].mxu0 %v550
        %v714 = vpop.f32.mrb[0].mxu0
        %v715 = vadd.f32 0.0, %v714
        %v716 = vpop.f32.mrb[0].mxu0
        %v717 = vpop.f32.mrb[0].mxu0
        %v718 = vpop.f32.mrb[0].mxu0
        %719 = vdwg.mxu0
        %v720 = vadd.f32 %v549, %v715
        %721 = vst [vmem:[%s364] sm:$0xff] %v720
        // Predicated region
        $region65: #{tpu_custom_call.1} parent=47 // pred_check
          %p722 = pneg %p373
        $region66: #{tpu_custom_call.1} parent=47 // pred_check_branch
          %724 = sbr.rel (%p722) target = $region68
        $region67: #{tpu_custom_call.1} parent=47 // pred_region
          %v725 = vld [vmem:[%s364] sm:$0xff]
          %v726 = vld [vmem:[%s6] sm:$0x1]
          %v728 = vlaneseq
          %v729 = vshrl.u32 %v728, 7
          %v730 = vsub.s32 0, %v729
          %v731 = vrot.slane %v726, %v730
          %v733 = vadd.f32 %v725, %v731
          %734 = vst [vmem:[%s364] sm:$0xff] %v733
        $region68: #{tpu_custom_call.1} parent=47 // pred_fallthru
          _
        %s735 = sand.u32 %s212, 1
        %s736 = scalar_lea.sflag [#allocation5], %s735
        %s737 = sand.u32 %s212, 1
        %s738 = smul.addr %s737, 8
        %s739 = scalar_lea.vmem [#allocation9], %s738
        // Predicated region
        $region69: #{tpu_custom_call.1} parent=47 // pred_check
          %p740 = pneg %p222
        $region70: #{tpu_custom_call.1} parent=47 // pred_check_branch
          %742 = sbr.rel (%p740) target = $region72
        $region71: #{tpu_custom_call.1} parent=47 // pred_region
          %s744 = ssub.s32 128, 128
          %745 = vsyncadd %s736, %s744
          %s746 = smul.addr %s29, 128
          %s747 = scalar_lea.hbm %s7, %s746
          %s749 = sshll.u32 %s739, 4
          %s750 = int_to_ptr.vmem [resolvable:$true] %s749
          %752 = dma.vmem_to_hbm [thread:$0]  %s750, 128, %s747, %s736
        $region72: #{tpu_custom_call.1} parent=47 // pred_fallthru
          _
      $region48: #{tpu_custom_call.1} parent=5 // pred_fallthru
        _
      %p753 = scmp.le.s32.totalorder 2, %s20
      // Predicated region
      $region73: #{tpu_custom_call.1} parent=5 // pred_check
        %p754 = pneg %p753
      $region74: #{tpu_custom_call.1} parent=5 // pred_check_branch
        %756 = sbr.rel (%p754) target = $region76
      $region75: #{tpu_custom_call.1} parent=5 // pred_region
        %s757 = ssub.s32 %s20, 2
        // Predicated region
        $region77: #{tpu_custom_call.1} parent=75 // pred_check
          %p758 = pneg %p228
        $region78: #{tpu_custom_call.1} parent=75 // pred_check_branch
          %760 = sbr.rel (%p758) target = $region80
        $region79: #{tpu_custom_call.1} parent=75 // pred_region
          %s761 = sand.u32 %s213, 1
          %s762 = scalar_lea.sflag [#allocation5], %s761
          %s763 = sand.u32 %s213, 1
          %s764 = smul.addr %s763, 8
          %s765 = scalar_lea.vmem [#allocation9], %s764
          %766 = dma.done %s762, 128
        $region80: #{tpu_custom_call.1} parent=75 // pred_fallthru
          _
      $region76: #{tpu_custom_call.1} parent=5 // pred_fallthru
        _
    $region6: #{tpu_custom_call.1} parent=1 // loop_footer
      %s24 = sadd.s32 1, %s20
    $region7: #{tpu_custom_call.1} parent=1 // loop_footer_branch
      %19 = sbr.rel target = $region3
    $region8: #{tpu_custom_call.1} parent=1 // loop_exit
      _
    %767 = vsyncpa [#allocation4], 1
    %s768 = scalar_lea.sflag [#allocation4], 1
    %769 = vsyncpa %s768, 1
    %770 = vsyncpa [#allocation7], 1
    %771 = vsyncpa [#allocation5], 1
    %s772 = scalar_lea.sflag [#allocation5], 1
    %773 = vsyncpa %s772, 1

</llo_original>
